<compile_context>
chip_gen: v7x
topology: tpu7x:2x2x1
jax: 0.10.0
libtpu: 0.0.40
codegen_flags: <defaults>
</compile_context>

<pallas_src>
import functools

import jax
import jax.numpy as jnp
from jax.experimental import pallas as pl
from jax.experimental.pallas import tpu as pltpu

LANES = 128                   # TPU vreg lane width
OUT_TILE_BYTES = 4 << 20      # per-step f32 output tile budget (~4 MiB)
MIN_SPLIT_ROWS = 1024         # force >=2 grid steps above this many rows (v7x megacore)
LOG2E = 1.4426950408889634


def _cdiv(a, b):
    return -(-a // b)


def _round_up(x, m):
    return ((x + m - 1) // m) * m


def _next_pow2(x):
    return 1 << (max(x, 1) - 1).bit_length()


def _gaussian_rbf_kernel(x_ref, e_ref, oc_ref, o_ref):
    # x_ref:  (tile_r, group)   packed input scalars, group consecutive per row
    # e_ref:  (group, lanes)    one-hot expansion matrix: E[g, j] = 1 iff j // n_rbf_pad == g
    # oc_ref: (2, lanes)        row 0: offsets tiled over lanes; row 1: -0.5*log2(e)/widths**2
    # o_ref:  (tile_r, lanes)   lane-dense output tile
    tile_r, group = x_ref.shape
    lanes = o_ref.shape[1]

    if group == 1:
        # lanes hold copies of the single packed scalar (n_rbf >= 128 case)
        x_rep = jnp.broadcast_to(x_ref[...], (tile_r, lanes))
    else:
        # Lane expansion on the otherwise-idle MXU. Exact: weights are exactly 0/1
        # in f32 with f32 accumulation, so lane j receives exactly x[:, j // n_rbf_pad].
        x_rep = jnp.dot(x_ref[...], e_ref[...], preferred_element_type=jnp.float32)

    off = oc_ref[0:1, :]        # (1, lanes) -> sublane-broadcast against x_rep
    coeff2 = oc_ref[1:2, :]     # (1, lanes), already includes log2(e)
    diff = x_rep - off
    o_ref[...] = jnp.exp2(coeff2 * (diff * diff)).astype(o_ref.dtype)


@functools.partial(jax.jit, static_argnames=("out_dtype",))
def gaussian_rbf(inputs, offsets, widths, out_dtype=jnp.float32):
    """inputs: any shape. offsets/widths: (n_rbf,). Returns (*inputs.shape, n_rbf)."""
    orig_shape = inputs.shape
    n_rbf = offsets.shape[0]

    # Choose a lane-padded n_rbf and packing factor so every output row is a
    # multiple of 128 lanes (unmasked stores on all generations).
    if n_rbf <= LANES:
        n_rbf_pad = _next_pow2(n_rbf)          # divisor of 128
        group = LANES // n_rbf_pad
    else:
        n_rbf_pad = _round_up(n_rbf, LANES)
        group = 1
    lanes = group * n_rbf_pad

    flat = inputs.reshape(-1).astype(jnp.float32)
    n = flat.shape[0]
    rows = max(1, _cdiv(n, group))

    # Tile sizing: large tiles to amortize per-step overhead, >=2 steps for v7x
    # megacore once there is enough work, tail padding bounded to <8 rows.
    max_tile_rows = max(8, (OUT_TILE_BYTES // (lanes * 4)) // 8 * 8)
    num_tiles = _cdiv(rows, max_tile_rows)
    if num_tiles < 2 and rows >= MIN_SPLIT_ROWS:
        num_tiles = 2
    tile_r = _round_up(_cdiv(rows, num_tiles), 8)
    rows_pad = tile_r * num_tiles

    n_pad = rows_pad * group
    if n_pad != n:
        flat = jnp.pad(flat, (0, n_pad - n))
    x2d = flat.reshape(rows_pad, group)

    # Hoisted constants (computed once, fused under jit).
    off = offsets.astype(jnp.float32)
    w = widths.astype(jnp.float32)
    coeff2 = (-0.5 * LOG2E) / (w * w)          # exp(c*d^2) == exp2((c*log2e)*d^2)
    if n_rbf_pad != n_rbf:
        pad = n_rbf_pad - n_rbf
        off = jnp.pad(off, (0, pad))
        coeff2 = jnp.pad(coeff2, (0, pad))     # 0 -> exp2(0)=1 in pad lanes (stripped below)
    oc = jnp.stack([jnp.tile(off, group), jnp.tile(coeff2, group)])        # (2, lanes)
    lane_group = jnp.arange(lanes, dtype=jnp.int32) // n_rbf_pad
    e_mat = (lane_group[None, :] ==
             jnp.arange(group, dtype=jnp.int32)[:, None]).astype(jnp.float32)  # (group, lanes)

    out = pl.pallas_call(
        _gaussian_rbf_kernel,
        out_shape=jax.ShapeDtypeStruct((rows_pad, lanes), out_dtype),
        grid_spec=pltpu.PrefetchScalarGridSpec(
            num_scalar_prefetch=0,
            grid=(num_tiles,),
            in_specs=[
                pl.BlockSpec((tile_r, group), lambda i: (i, 0)),
                pl.BlockSpec((group, lanes), lambda i: (0, 0)),
                pl.BlockSpec((2, lanes), lambda i: (0, 0)),
            ],
            out_specs=pl.BlockSpec((tile_r, lanes), lambda i: (i, 0)),
        ),
        compiler_params=pltpu.CompilerParams(
            dimension_semantics=("parallel",),
            vmem_limit_bytes=32 * 1024 * 1024,
        ),
    )(x2d, e_mat, oc)

    # Row-major (rows_pad, group*n_rbf_pad) is bit-identical to
    # (rows_pad*group, n_rbf_pad): the reshape is free metadata.
    out = out.reshape(rows_pad * group, n_rbf_pad)[:n, :n_rbf]
    return out.reshape(*orig_shape, n_rbf)


def make_gaussian_rbf_params(cutoff=5.0, n_rbf=16, start=0.0):
    """Deterministic parameter init matching the PyTorch __init__."""
    offsets = jnp.linspace(start, cutoff, n_rbf, dtype=jnp.float32)
    width = jnp.abs(offsets[1] - offsets[0])
    widths = width * jnp.ones_like(offsets)
    return offsets, widths


def _reference(inputs, offsets, widths):
    coeff = -0.5 / (widths ** 2)
    diff = inputs[..., None].astype(jnp.float32) - offsets
    return jnp.exp(coeff * diff * diff)


if __name__ == "__main__":
    key = jax.random.PRNGKey(0)
    k1, k2, k3, k4, k5 = jax.random.split(key, 5)
    cutoff, n_rbf = 5.0, 16
    offsets, widths = make_gaussian_rbf_params(cutoff, n_rbf)

    # Case 1: small batch of pairwise distances (batch=2, atoms=8, atoms=8).
    x1 = jax.random.uniform(k1, (2, 8, 8), dtype=jnp.float32, minval=0.0, maxval=cutoff)
    y1 = jax.block_until_ready(gaussian_rbf(x1, offsets, widths))
    assert y1.shape == (2, 8, 8, n_rbf), y1.shape
    assert jnp.allclose(y1, _reference(x1, offsets, widths), atol=2e-6, rtol=2e-5)

    # Case 2: ragged size (not a multiple of the packing factor) -> tail padding path.
    x2 = jax.random.uniform(k2, (3, 7), dtype=jnp.float32, minval=0.0, maxval=cutoff)
    y2 = jax.block_until_ready(gaussian_rbf(x2, offsets, widths))
    assert y2.shape == (3, 7, n_rbf), y2.shape
    assert jnp.allclose(y2, _reference(x2, offsets, widths), atol=2e-6, rtol=2e-5)

    # Case 3: large enough to split into >=2 grid steps (v7x megacore path).
    x3 = jax.random.uniform(k3, (16, 32, 32), dtype=jnp.float32, minval=0.0, maxval=cutoff)
    y3 = jax.block_until_ready(gaussian_rbf(x3, offsets, widths))
    assert y3.shape == (16, 32, 32, n_rbf), y3.shape
    assert jnp.allclose(y3, _reference(x3, offsets, widths), atol=2e-6, rtol=2e-5)

    # Case 4: n_rbf that does not divide 128 (20 -> padded to 32 lanes per scalar).
    offsets20, widths20 = make_gaussian_rbf_params(cutoff, 20)
    x4 = jax.random.uniform(k4, (5, 11), dtype=jnp.float32, minval=0.0, maxval=cutoff)
    y4 = jax.block_until_ready(gaussian_rbf(x4, offsets20, widths20))
    assert y4.shape == (5, 11, 20), y4.shape
    assert jnp.allclose(y4, _reference(x4, offsets20, widths20), atol=2e-6, rtol=2e-5)

    # Case 5: n_rbf > 128 (group=1, 256-lane rows).
    offsets130, widths130 = make_gaussian_rbf_params(cutoff, 130)
    x5 = jax.random.uniform(k5, (4, 6), dtype=jnp.float32, minval=0.0, maxval=cutoff)
    y5 = jax.block_until_ready(gaussian_rbf(x5, offsets130, widths130))
    assert y5.shape == (4, 6, 130), y5.shape
    assert jnp.allclose(y5, _reference(x5, offsets130, widths130), atol=2e-6, rtol=2e-5)

    print("KERNEL_OK")
</pallas_src>

<mosaic_0001>
module attributes {stable_mosaic.version = 11 : i64} {
  func.func @_gaussian_rbf_kernel(%arg0: i32, %arg1: memref<16x8xf32, #tpu.memory_space<vmem>>, %arg2: memref<8x128xf32, #tpu.memory_space<vmem>>, %arg3: memref<2x128xf32, #tpu.memory_space<vmem>>, %arg4: memref<16x128xf32, #tpu.memory_space<vmem>>) attributes {dimension_semantics = [#tpu.dimension_semantics<parallel>], iteration_bounds = array<i64: 1>, scalar_prefetch = 0 : i64, scratch_operands = 0 : i64, tpu.core_type = #tpu.core_type<tc>, window_params = [{transform_indices = @transform_0, window_bounds = array<i64: 16, 8>}, {pipeline_mode = #tpu.pipeline_mode<synchronous>, transform_indices = @transform_1, window_bounds = array<i64: 8, 128>}, {pipeline_mode = #tpu.pipeline_mode<synchronous>, transform_indices = @transform_2, window_bounds = array<i64: 2, 128>}, {transform_indices = @transform_3, window_bounds = array<i64: 16, 128>}]} {
    %c0 = arith.constant 0 : index
    %c0_0 = arith.constant 0 : index
    %0 = vector.load %arg1[%c0, %c0_0] : memref<16x8xf32, #tpu.memory_space<vmem>>, vector<16x8xf32>
    %c0_1 = arith.constant 0 : index
    %c0_2 = arith.constant 0 : index
    %1 = vector.load %arg2[%c0_1, %c0_2] : memref<8x128xf32, #tpu.memory_space<vmem>>, vector<8x128xf32>
    %cst = arith.constant dense<0.000000e+00> : vector<16x128xf32>
    %2 = tpu.matmul %0, %1, %cst {dimension_numbers = #tpu.dot_dimension_numbers<[1], [0], [0], [1], [0, 0, 1, 1], [], []>} : vector<16x8xf32>, vector<8x128xf32>, vector<16x128xf32> -> vector<16x128xf32>
    %c0_3 = arith.constant 0 : index
    %c0_4 = arith.constant 0 : index
    %3 = vector.load %arg3[%c0_3, %c0_4] : memref<2x128xf32, #tpu.memory_space<vmem>>, vector<1x128xf32>
    %c1 = arith.constant 1 : index
    %c0_5 = arith.constant 0 : index
    %4 = vector.load %arg3[%c1, %c0_5] : memref<2x128xf32, #tpu.memory_space<vmem>>, vector<1x128xf32>
    %5 = vector.broadcast %3 : vector<1x128xf32> to vector<16x128xf32>
    %6 = arith.subf %2, %5 : vector<16x128xf32>
    %7 = arith.mulf %6, %6 : vector<16x128xf32>
    %8 = vector.broadcast %4 : vector<1x128xf32> to vector<16x128xf32>
    %9 = arith.mulf %8, %7 : vector<16x128xf32>
    %10 = math.exp2 %9 : vector<16x128xf32>
    %c0_6 = arith.constant 0 : index
    %c0_7 = arith.constant 0 : index
    %11 = vector.load %arg4[%c0_6, %c0_7] : memref<16x128xf32, #tpu.memory_space<vmem>>, vector<16x128xf32>
    tpu.vector_store %arg4[%c0_6, %c0_7], %10 {strides = array<i32>} : memref<16x128xf32, #tpu.memory_space<vmem>>, vector<16x128xf32>,
    return
  }
  func.func @transform_0(%arg0: i32) -> (i32, i32) {
    %c0_i32 = arith.constant 0 : i32
    %c0_i32_0 = arith.constant 0 : i32
    return %arg0, %c0_i32 : i32, i32
  }
  func.func @transform_1(%arg0: i32) -> (i32, i32) {
    %c0_i32 = arith.constant 0 : i32
    %c0_i32_0 = arith.constant 0 : i32
    %c0_i32_1 = arith.constant 0 : i32
    return %c0_i32, %c0_i32_0 : i32, i32
  }
  func.func @transform_2(%arg0: i32) -> (i32, i32) {
    %c0_i32 = arith.constant 0 : i32
    %c0_i32_0 = arith.constant 0 : i32
    %c0_i32_1 = arith.constant 0 : i32
    return %c0_i32, %c0_i32_0 : i32, i32
  }
  func.func @transform_3(%arg0: i32) -> (i32, i32) {
    %c0_i32 = arith.constant 0 : i32
    %c0_i32_0 = arith.constant 0 : i32
    return %arg0, %c0_i32 : i32, i32
  }
}

</mosaic_0001>

<llo_original>
// kernel: tile.17
$region0: #{tile.17}
  #allocation0 [shape = 's32[1]{0}', space=sflag, size = 0x4, scoped, tag = 'scoped memory for tile.17']
  %s0 = inlined_call_operand.vmem [shape: f32[16], index: 0, kind: input, shape index: {}]
  %s1 = inlined_call_operand.vmem [shape: f32[8,16], index: 1, kind: output, shape index: {}]
  // Predicated region
  $region2: #{tile.17} parent=0 // pred_check
    _
  $region3: #{tile.17} parent=0 // pred_check_branch
    %3 = sbr.rel (0) target = $region5
  $region4: #{tile.17} parent=0 // pred_region
    _
  $region5: #{tile.17} parent=0 // pred_fallthru
    _
  %v4 = vld [vmem:[%s0] ss:$0 sm:$0xff]
  %5 = vst [vmem:[%s1] sm:$0xff] %v4

// kernel: tile.19
$region0: #{tile.19}
  %s0 = inlined_call_operand.vmem [shape: f32[8,16], index: 0, kind: input, shape index: {}]
  %s1 = inlined_call_operand.vmem [shape: f32[1,128], index: 1, kind: output, shape index: {}]
  $region1: #{tile.19} parent=0
    #allocation0 [shape = 'u8[4096]{0}', space=vmem, size = 0x1000, scoped, tag = 'scoped mem for output reshape']
    %v2 = vld [vmem:[%s0] sm:$0x1]
    %vm3 = vcmask 130048
    %4 = vst.msk [vmem:[#allocation0] sm:$0x1] %vm3, %v2
    %s5 = scalar_lea.vmem %s0, 7
    %v6 = vld [vmem:[%s5] sm:$0x1]
    %7 = vrot.lane.b32.xlu0 %v6, 112
    %v8 = vpop.permute.xlu0 %7
    %vm9 = vcmask 1048448
    %10 = vst.msk [vmem:[#allocation0] sm:$0x1] %vm9, %v8
    %s11 = scalar_lea.vmem %s0, 6
    %v12 = vld [vmem:[%s11] sm:$0x1]
    %13 = vrot.lane.b32.xlu0 %v12, 96
    %v14 = vpop.permute.xlu0 %13
    %vm15 = vcmask 917248
    %16 = vst.msk [vmem:[#allocation0] sm:$0x1] %vm15, %v14
    %s17 = scalar_lea.vmem %s0, 5
    %v18 = vld [vmem:[%s17] sm:$0x1]
    %19 = vrot.lane.b32.xlu0 %v18, 80
    %v20 = vpop.permute.xlu0 %19
    %vm21 = vcmask 786048
    %22 = vst.msk [vmem:[#allocation0] sm:$0x1] %vm21, %v20
    %s23 = scalar_lea.vmem %s0, 4
    %v24 = vld [vmem:[%s23] sm:$0x1]
    %25 = vrot.lane.b32.xlu0 %v24, 64
    %v26 = vpop.permute.xlu0 %25
    %vm27 = vcmask 654848
    %28 = vst.msk [vmem:[#allocation0] sm:$0x1] %vm27, %v26
    %s29 = scalar_lea.vmem %s0, 3
    %v30 = vld [vmem:[%s29] sm:$0x1]
    %31 = vrot.lane.b32.xlu0 %v30, 48
    %v32 = vpop.permute.xlu0 %31
    %vm33 = vcmask 523648
    %34 = vst.msk [vmem:[#allocation0] sm:$0x1] %vm33, %v32
    %s35 = scalar_lea.vmem %s0, 2
    %v36 = vld [vmem:[%s35] sm:$0x1]
    %37 = vrot.lane.b32.xlu0 %v36, 32
    %v38 = vpop.permute.xlu0 %37
    %vm39 = vcmask 392448
    %40 = vst.msk [vmem:[#allocation0] sm:$0x1] %vm39, %v38
    %s41 = scalar_lea.vmem %s0, 1
    %v42 = vld [vmem:[%s41] sm:$0x1]
    %43 = vrot.lane.b32.xlu0 %v42, 16
    %v44 = vpop.permute.xlu0 %43
    %vm45 = vcmask 261248
    %46 = vst.msk [vmem:[#allocation0] sm:$0x1] %vm45, %v44
    %s48 = sshllo.u32 0, 1
    %v50 = vld [vmem:[#allocation0] sm:%s48]
    %s51 = sshllo.u32 0, 1
    %52 = vst [vmem:[%s1] sm:%s51] %v50

// kernel: gaussian_rbf.1
$region0: #{gaussian_rbf.1}
  #allocation0 [shape = 'u32[]', space=smem, size = 0x4, offset = 0x4, fixed_abs, tag = 'smem constant byte address 0x4 - core index']
  #allocation1 [shape = 'u32[144,128]{1,0:T(1,128)}', space=vmem, size = 0x12000, scoped, tag = 'internal scratch']
  %s0 = inlined_call_operand.vmem [shape: f32[16,8], index: 0, kind: input, shape index: {}]
  %s1 = inlined_call_operand.vmem [shape: f32[8,128], index: 1, kind: input, shape index: {}]
  %s2 = inlined_call_operand.vmem [shape: f32[2,128], index: 2, kind: input, shape index: {}]
  %s3 = inlined_call_operand.vmem [shape: f32[16,128], index: 3, kind: output, shape index: {}]
  %s4 = sld [smem:[#allocation0]]
  $region22: #{gaussian_rbf.1} parent=0
    _
  %s6 = ssub.s32 1, %s4
  %s7 = scalar_select 0, %s6, %s4
  // Predicated region
  $region2: #{gaussian_rbf.1} parent=0 // pred_check
    _
  $region3: #{gaussian_rbf.1} parent=0 // pred_check_branch
    %9 = sbr.rel (0) target = $region5
  $region4: #{gaussian_rbf.1} parent=0 // pred_region
    _
  $region5: #{gaussian_rbf.1} parent=0 // pred_fallthru
    _
  // Predicated region
  $region6: #{gaussian_rbf.1} parent=0 // pred_check
    _
  $region7: #{gaussian_rbf.1} parent=0 // pred_check_branch
    %11 = sbr.rel (0) target = $region9
  $region8: #{gaussian_rbf.1} parent=0 // pred_region
    _
  $region9: #{gaussian_rbf.1} parent=0 // pred_fallthru
    _
  // Predicated region
  $region10: #{gaussian_rbf.1} parent=0 // pred_check
    _
  $region11: #{gaussian_rbf.1} parent=0 // pred_check_branch
    %13 = sbr.rel (0) target = $region13
  $region12: #{gaussian_rbf.1} parent=0 // pred_region
    _
  $region13: #{gaussian_rbf.1} parent=0 // pred_fallthru
    _
  %v14 = vld [vmem:[%s0] sm:$0xff]
  %v15 = vld [vmem:[%s0 + $0x8] sm:$0xff]
  %v16 = vld [vmem:[%s1] sm:$0xff]
  %vm17 = vcmask 64512
  %v19 = vsel %vm17, %v14, 0
  %v22 = vsel %vm17, %v15, 0
  %24 = vmatprep.subr.mxu0 0.0
  %25 = vmatpush1.msra.mxu0 %v16
  %26 = vmatprep.subr.mxu0 0.0
  %27 = vmatpush1.msra.mxu0 0.0
  %28 = vmatprep.subr.mxu0 0.0
  %29 = vmatpush1.msra.mxu0 0.0
  %30 = vmatprep.subr.mxu0 0.0
  %31 = vmatpush1.msra.mxu0 0.0
  %32 = vmatprep.subr.mxu0 0.0
  %33 = vmatpush1.msra.mxu0 0.0
  %34 = vmatprep.subr.mxu0 0.0
  %35 = vmatpush1.msra.mxu0 0.0
  %36 = vmatprep.subr.mxu0 0.0
  %37 = vmatpush1.msra.mxu0 0.0
  %38 = vmatprep.subr.mxu0 0.0
  %39 = vmatpush1.msra.mxu0 0.0
  %40 = vmatprep.subr.mxu0 0.0
  %41 = vmatpush1.msra.mxu0 0.0
  %42 = vmatprep.subr.mxu0 0.0
  %43 = vmatpush1.msra.mxu0 0.0
  %44 = vmatprep.subr.mxu0 0.0
  %45 = vmatpush1.msra.mxu0 0.0
  %46 = vmatprep.subr.mxu0 0.0
  %47 = vmatpush1.msra.mxu0 0.0
  %48 = vmatprep.subr.mxu0 0.0
  %49 = vmatpush1.msra.mxu0 0.0
  %50 = vmatprep.subr.mxu0 0.0
  %51 = vmatpush1.msra.mxu0 0.0
  %52 = vmatprep.subr.mxu0 0.0
  %53 = vmatpush1.msra.mxu0 0.0
  %54 = vmatprep.subr.mxu0 0.0
  %55 = vmatpush1.msra.mxu0 0.0
  %56 = vmatprep.subr.mxu0 0.0
  %57 = vmatpush1.msra.mxu0 0.0
  %58 = vmatprep.subr.mxu0 0.0
  %59 = vmatpush1.msra.mxu0 0.0
  %60 = vmatprep.subr.mxu0 0.0
  %61 = vmatpush1.msra.mxu0 0.0
  %62 = vmatprep.subr.mxu0 0.0
  %63 = vmatpush1.msra.mxu0 0.0
  %64 = vmatprep.subr.mxu0 0.0
  %65 = vmatpush1.msra.mxu0 0.0
  %66 = vmatprep.subr.mxu0 0.0
  %67 = vmatpush1.msra.mxu0 0.0
  %68 = vmatprep.subr.mxu0 0.0
  %69 = vmatpush1.msra.mxu0 0.0
  %70 = vmatprep.subr.mxu0 0.0
  %71 = vmatpush1.msra.mxu0 0.0
  %72 = vmatprep.subr.mxu0 0.0
  %73 = vmatpush1.msra.mxu0 0.0
  %74 = vmatprep.subr.mxu0 0.0
  %75 = vmatpush1.msra.mxu0 0.0
  %76 = vmatprep.subr.mxu0 0.0
  %77 = vmatpush1.msra.mxu0 0.0
  %78 = vmatprep.subr.mxu0 0.0
  %79 = vmatpush1.msra.mxu0 0.0
  %80 = vmatprep.subr.mxu0 0.0
  %81 = vmatpush1.msra.mxu0 0.0
  %82 = vmatprep.subr.mxu0 0.0
  %83 = vmatpush1.msra.mxu0 0.0
  %84 = vmatprep.subr.mxu0 0.0
  %85 = vmatpush1.msra.mxu0 0.0
  %86 = vmatprep.subr.mxu0 0.0
  %87 = vmatpush1.msra.mxu0 0.0
  %88 = vmatprep.mubr.f32.mxu0 0.0
  %89 = vmatmul.mubr.f32.gmra.mrb[0].mxu0 %v19
  %v90 = vpop.f32.mrb[0].mxu0
  %v91 = vadd.f32 0.0, %v90
  %v92 = vpop.f32.mrb[0].mxu0
  %93 = vmatprep.mubr.f32.mxu0 0.0
  %94 = vmatmul.mubr.f32.gmra.mrb[0].mxu0 %v22
  %v95 = vpop.f32.mrb[0].mxu0
  %v96 = vadd.f32 0.0, %v95
  %v97 = vpop.f32.mrb[0].mxu0
  %98 = vdwg.mxu0
  %v99 = vld [vmem:[%s2] sm:$0x1]
  %v100 = vld [vmem:[%s2 + $0x1] sm:$0x1]
  %v101 = vlaneseq
  %v102 = vshrl.u32 %v101, 7
  %v103 = vsub.s32 0, %v102
  %v104 = vrot.slane %v99, %v103
  %v105 = vsub.f32 %v91, %v104
  %v106 = vsub.f32 %v96, %v104
  %v107 = vmul.f32 %v105, %v105
  %v108 = vmul.f32 %v106, %v106
  %v109 = vlaneseq
  %v110 = vshrl.u32 %v109, 7
  %v111 = vsub.s32 0, %v110
  %v112 = vrot.slane %v100, %v111
  %v113 = vmul.f32 %v112, %v107
  %v114 = vmul.f32 %v112, %v108
  %v115 = vpow.pop %v113
  %v116 = vpow.pop %v114
  %117 = vst [vmem:[%s3] sm:$0xff] %v115
  %118 = vst [vmem:[%s3 + $0x8] sm:$0xff] %v116
  // Predicated region
  $region14: #{gaussian_rbf.1} parent=0 // pred_check
    _
  $region15: #{gaussian_rbf.1} parent=0 // pred_check_branch
    %120 = sbr.rel (0) target = $region17
  $region16: #{gaussian_rbf.1} parent=0 // pred_region
    _
  $region17: #{gaussian_rbf.1} parent=0 // pred_fallthru
    _
  // Predicated region
  $region18: #{gaussian_rbf.1} parent=0 // pred_check
    _
  $region19: #{gaussian_rbf.1} parent=0 // pred_check_branch
    %122 = sbr.rel (0) target = $region21
  $region20: #{gaussian_rbf.1} parent=0 // pred_region
    _
  $region21: #{gaussian_rbf.1} parent=0 // pred_fallthru
    _

</llo_original>
